<compile_context>
chip_gen: v6e
topology: v6e:2x2x1
jax: 0.10.0
libtpu: 0.0.40
codegen_flags: <defaults>
</compile_context>

<pallas_src>
import jax
import jax.numpy as jnp
from jax import lax
from jax.experimental import pallas as pl
from jax.experimental.pallas import tpu as pltpu


def _mlp_sigmoid(avg, mx, w1t, w2t, b_rows, out_dtype):
    """Shared MLP on stacked pooled rows: one fc1 + one fc2 matmul total."""
    pooled = jnp.concatenate([avg, mx], axis=0)                 # [2*b_rows, C]
    h = jnp.dot(pooled, w1t, preferred_element_type=jnp.float32)
    h = jnp.maximum(h, 0.0)                                     # ReLU
    h = jnp.dot(h, w2t, preferred_element_type=jnp.float32)
    logits = h[:b_rows] + h[b_rows:]                            # avg_out + max_out
    return jax.nn.sigmoid(logits).astype(out_dtype)


def _make_single_step_kernel(hw, b_tile):
    """hw_tile == HW: one grid step per batch block, reduce + MLP in place."""

    def kernel(x_ref, w1t_ref, w2t_ref, o_ref):
        tile = x_ref[...]                                       # [b_tile, C, HW]
        s = jnp.sum(tile, axis=-1, dtype=jnp.float32)           # [b_tile, C]
        m = jnp.max(tile, axis=-1).astype(jnp.float32)
        avg = s * jnp.float32(1.0 / hw)
        o_ref[0] = _mlp_sigmoid(avg, m,
                                w1t_ref[...].astype(jnp.float32),
                                w2t_ref[...].astype(jnp.float32),
                                b_tile, o_ref.dtype)

    return kernel


def _make_streaming_kernel(hw, hw_tile, b_tile, needs_mask):
    """Multi HW step reduction with lane-wide (deferred-reduce) accumulators."""
    assert hw_tile % 128 == 0
    n_chunks = hw_tile // 128
    unroll = min(n_chunks, 8)

    def kernel(x_ref, w1t_ref, w2t_ref, o_ref, sum_acc, max_acc):
        # x_ref:   [b_tile, C, hw_tile]   current spatial tile (input dtype)
        # sum_acc / max_acc: [b_tile, C, 128]  f32 lane-wide running reductions
        hw_id = pl.program_id(1)
        last = pl.num_programs(1) - 1

        @pl.when(hw_id == 0)
        def _init():
            sum_acc[...] = jnp.zeros_like(sum_acc)
            max_acc[...] = jnp.full_like(max_acc, -jnp.inf)

        def accumulate(masked):
            # Lane-aligned 128-wide chunks: pure VPU add/max into the lane-wide
            # accumulators, no cross-lane (XLU) work in the steady state.
            def body(j, carry):
                off = pl.multiple_of(j * 128, 128)
                chunk = x_ref[:, :, pl.ds(off, 128)].astype(jnp.float32)
                if masked:
                    # Mask in f32 (safe even for low-precision inputs).
                    lane = lax.broadcasted_iota(jnp.int32, (1, 1, 128), 2)
                    pos = hw_id * hw_tile + off + lane
                    valid = pos < hw
                    c_sum = jnp.where(valid, chunk, 0.0)
                    c_max = jnp.where(valid, chunk, -jnp.inf)
                else:
                    c_sum, c_max = chunk, chunk
                sum_acc[...] += c_sum
                max_acc[...] = jnp.maximum(max_acc[...], c_max)
                return carry

            lax.fori_loop(0, n_chunks, body, 0, unroll=unroll)

        if needs_mask:
            # Only the last HW step can be ragged -> keep masking off the
            # steady-state path entirely.
            @pl.when(hw_id != last)
            def _steady():
                accumulate(masked=False)

            @pl.when(hw_id == last)
            def _ragged():
                accumulate(masked=True)
        else:
            accumulate(masked=False)

        @pl.when(hw_id == last)
        def _finalize():
            # Single cross-lane reduce + relayout per batch block.
            s = jnp.sum(sum_acc[...], axis=-1)                  # [b_tile, C]
            m = jnp.max(max_acc[...], axis=-1)
            avg = s * jnp.float32(1.0 / hw)
            o_ref[0] = _mlp_sigmoid(avg, m,
                                    w1t_ref[...].astype(jnp.float32),
                                    w2t_ref[...].astype(jnp.float32),
                                    b_tile, o_ref.dtype)

    return kernel


def channel_attention(x, w1, w2, *, b_tile=None, hw_tile=None,
                      target_tile_bytes=8 << 20, vmem_limit_bytes=None):
    """CBAM ChannelAttention forward.

    x:  [B, C, H, W] (NCHW).  w1: [R, C], w2: [C, R] (Conv2d 1x1 weights with
    the trailing 1x1 squeezed, R = C // 16).  Returns [B, C, 1, 1].

    target_tile_bytes: per-buffer x tile budget (~8 MiB default; 12-16 MiB is
    a good choice on v7x, 6-7 MiB keeps v5e inside its default scoped VMEM
    without raising the limit — we raise vmem_limit_bytes anyway).
    """
    B, C, H, W = x.shape
    R = w1.shape[0]
    HW = H * W
    dtype_bytes = jnp.dtype(x.dtype).itemsize

    x_flat = x.reshape(B, C, HW)       # contiguous reshape; no padding / copy
    w1t = jnp.transpose(w1)            # [C, R]
    w2t = jnp.transpose(w2)            # [R, C]

    image_bytes = C * HW * dtype_bytes

    # ---- spatial tile --------------------------------------------------
    if hw_tile is not None:
        hw_tile = int(hw_tile)
        hw_tile = HW if hw_tile >= HW else max(128, (hw_tile // 128) * 128)
    elif image_bytes <= target_tile_bytes:
        hw_tile = HW                                   # whole image per block
    else:
        # Largest multiple of 128 fitting the budget at b_tile = 1 (lane floor
        # of 128 only overshoots the budget for C > ~16K channels).
        t = (target_tile_bytes // (C * dtype_bytes)) // 128 * 128
        hw_cap = -(-HW // 128) * 128
        hw_tile = int(min(max(128, t), hw_cap))
        if hw_tile >= HW:
            hw_tile = HW

    single_step = (hw_tile == HW)

    # ---- batch tile ------------------------------------------------------
    if b_tile is None:
        if single_step:
            b_tile = max(1, int(target_tile_bytes // max(1, image_bytes)))
            b_tile = min(b_tile, B, 8)
            # Keep >= 2 steps on the "parallel" batch axis so both v7x
            # TensorCores get work (no effect on single-TC v5e/v6e).
            if B >= 2:
                b_tile = min(b_tile, max(1, B // 2))
            # Avoid ragged batch blocks by default.
            while B % b_tile:
                b_tile -= 1
        else:
            b_tile = 1   # prefer long contiguous HW rows over batch packing
    b_tile = max(1, min(int(b_tile), B))

    nb = pl.cdiv(B, b_tile)
    tile_bytes = b_tile * C * hw_tile * dtype_bytes
    w_bytes = (w1.size + w2.size) * jnp.dtype(w1.dtype).itemsize

    if single_step:
        kernel = _make_single_step_kernel(HW, b_tile)
        grid = (nb,)
        in_specs = [
            pl.BlockSpec((b_tile, C, hw_tile), lambda b: (b, 0, 0)),
            pl.BlockSpec((C, R), lambda b: (0, 0)),
            pl.BlockSpec((R, C), lambda b: (0, 0)),
        ]
        out_specs = pl.BlockSpec((1, b_tile, C), lambda b: (b, 0, 0))
        scratch_shapes = []
        dim_sem = ("parallel",)
        acc_bytes = 0
    else:
        needs_mask = (HW % hw_tile) != 0
        kernel = _make_streaming_kernel(HW, hw_tile, b_tile, needs_mask)
        n_hw = pl.cdiv(HW, hw_tile)
        grid = (nb, n_hw)
        in_specs = [
            # x: stream spatial tiles; HW is the last ("arbitrary") grid axis.
            pl.BlockSpec((b_tile, C, hw_tile), lambda b, h: (b, 0, h)),
            # Weights: constant block index -> resident in VMEM.
            pl.BlockSpec((C, R), lambda b, h: (0, 0)),
            pl.BlockSpec((R, C), lambda b, h: (0, 0)),
        ]
        # Same block index across HW -> output resident across the reduction,
        # written once in the finalize step.
        out_specs = pl.BlockSpec((1, b_tile, C), lambda b, h: (b, 0, 0))
        scratch_shapes = [
            pltpu.VMEM((b_tile, C, 128), jnp.float32),   # lane-wide running sum
            pltpu.VMEM((b_tile, C, 128), jnp.float32),   # lane-wide running max
        ]
        dim_sem = ("parallel", "arbitrary")
        acc_bytes = 2 * b_tile * C * 128 * 4

    if vmem_limit_bytes is None:
        # Double-buffered x + weights + output block + accumulators + headroom.
        need = (2 * tile_bytes + 2 * w_bytes
                + 2 * b_tile * C * dtype_bytes + acc_bytes)
        vmem_limit_bytes = int(min(max(need + (8 << 20), 32 << 20), 56 << 20))

    out = pl.pallas_call(
        kernel,
        out_shape=jax.ShapeDtypeStruct((nb, b_tile, C), x.dtype),
        grid_spec=pltpu.PrefetchScalarGridSpec(
            num_scalar_prefetch=0,
            grid=grid,
            in_specs=in_specs,
            out_specs=out_specs,
            scratch_shapes=scratch_shapes),
        compiler_params=pltpu.CompilerParams(
            dimension_semantics=dim_sem,
            vmem_limit_bytes=vmem_limit_bytes),
    )(x_flat, w1t, w2t)

    # Ragged/overhanging batch rows (if any) are independent garbage; drop them.
    return out.reshape(nb * b_tile, C)[:B].reshape(B, C, 1, 1)


def reference_channel_attention(x, w1, w2):
    """Pure-JAX reference mirroring the PyTorch forward."""
    avg = jnp.mean(x, axis=(2, 3))          # [B, C]
    mx = jnp.max(x, axis=(2, 3))            # [B, C]

    def mlp(p):
        h = jnp.maximum(p @ w1.T, 0.0)      # fc1 + ReLU
        return h @ w2.T                     # fc2

    out = jax.nn.sigmoid(mlp(avg) + mlp(mx))
    B, C = out.shape
    return out.reshape(B, C, 1, 1)


if __name__ == "__main__":
    # Test 1: small shape -> single-step kernel (whole image per block),
    # b_tile auto-shrinks to 1 so the parallel batch axis has 2 steps.
    B, C, H, W = 2, 32, 16, 16
    R = C // 16
    kx, k1, k2 = jax.random.split(jax.random.PRNGKey(0), 3)
    x = jax.random.normal(kx, (B, C, H, W), dtype=jnp.float32)
    w1 = jax.random.normal(k1, (R, C), dtype=jnp.float32) * (1.0 / jnp.sqrt(C))
    w2 = jax.random.normal(k2, (C, R), dtype=jnp.float32) * (1.0 / jnp.sqrt(R))

    out = jax.block_until_ready(channel_attention(x, w1, w2))
    ref = reference_channel_attention(x, w1, w2)
    assert out.shape == (B, C, 1, 1)
    assert jnp.allclose(out, ref, atol=1e-5, rtol=1e-5), "mismatch vs reference (test 1)"

    # Test 2: force the streaming kernel with a ragged last HW tile
    # (HW = 400, hw_tile = 128 -> 4 HW steps, last one masked in-kernel).
    B2, C2, H2, W2 = 3, 48, 20, 20
    R2 = C2 // 16
    kx2, k12, k22 = jax.random.split(jax.random.PRNGKey(1), 3)
    x2 = jax.random.normal(kx2, (B2, C2, H2, W2), dtype=jnp.float32)
    w12 = jax.random.normal(k12, (R2, C2), dtype=jnp.float32) * (1.0 / jnp.sqrt(C2))
    w22 = jax.random.normal(k22, (C2, R2), dtype=jnp.float32) * (1.0 / jnp.sqrt(R2))

    out2 = jax.block_until_ready(channel_attention(x2, w12, w22, hw_tile=128))
    ref2 = reference_channel_attention(x2, w12, w22)
    assert jnp.allclose(out2, ref2, atol=1e-5, rtol=1e-5), "mismatch vs reference (test 2)"

    # Test 3: odd batch + HW not a multiple of 128 (full-extent last dim).
    B3, C3, H3, W3 = 5, 32, 10, 10
    R3 = C3 // 16
    kx3, k13, k23 = jax.random.split(jax.random.PRNGKey(2), 3)
    x3 = jax.random.normal(kx3, (B3, C3, H3, W3), dtype=jnp.float32)
    w13 = jax.random.normal(k13, (R3, C3), dtype=jnp.float32) * (1.0 / jnp.sqrt(C3))
    w23 = jax.random.normal(k23, (C3, R3), dtype=jnp.float32) * (1.0 / jnp.sqrt(R3))

    out3 = jax.block_until_ready(channel_attention(x3, w13, w23))
    ref3 = reference_channel_attention(x3, w13, w23)
    assert jnp.allclose(out3, ref3, atol=1e-5, rtol=1e-5), "mismatch vs reference (test 3)"

    print("KERNEL_OK")
</pallas_src>

<mosaic_0001>
module attributes {stable_mosaic.version = 11 : i64} {
  func.func @kernel(%arg0: i32, %arg1: memref<1x32x256xf32, #tpu.memory_space<vmem>>, %arg2: memref<32x2xf32, #tpu.memory_space<vmem>>, %arg3: memref<2x32xf32, #tpu.memory_space<vmem>>, %arg4: memref<1x1x32xf32, #tpu.memory_space<vmem>>) attributes {dimension_semantics = [#tpu.dimension_semantics<parallel>], iteration_bounds = array<i64: 2>, scalar_prefetch = 0 : i64, scratch_operands = 0 : i64, tpu.core_type = #tpu.core_type<tc>, window_params = [{transform_indices = @transform_0, window_bounds = array<i64: 1, 32, 256>}, {pipeline_mode = #tpu.pipeline_mode<synchronous>, transform_indices = @transform_1, window_bounds = array<i64: 32, 2>}, {pipeline_mode = #tpu.pipeline_mode<synchronous>, transform_indices = @transform_2, window_bounds = array<i64: 2, 32>}, {transform_indices = @transform_3, window_bounds = array<i64: 1, 1, 32>}]} {
    %c0 = arith.constant 0 : index
    %c0_0 = arith.constant 0 : index
    %c0_1 = arith.constant 0 : index
    %0 = vector.load %arg1[%c0, %c0_0, %c0_1] : memref<1x32x256xf32, #tpu.memory_space<vmem>>, vector<1x32x256xf32>
    %cst = arith.constant dense<0.000000e+00> : vector<1x32xf32>
    %1 = vector.multi_reduction <add>, %0, %cst [2] : vector<1x32x256xf32> to vector<1x32xf32>
    %cst_2 = arith.constant dense<0xFF800000> : vector<1x32xf32>
    %2 = vector.multi_reduction <maximumf>, %0, %cst_2 [2] : vector<1x32x256xf32> to vector<1x32xf32>
    %cst_3 = arith.constant 3.906250e-03 : f32
    %3 = vector.broadcast %cst_3 : f32 to vector<1x32xf32>
    %4 = arith.mulf %1, %3 : vector<1x32xf32>
    %c0_4 = arith.constant 0 : index
    %c0_5 = arith.constant 0 : index
    %5 = vector.load %arg2[%c0_4, %c0_5] : memref<32x2xf32, #tpu.memory_space<vmem>>, vector<32x2xf32>
    %c0_6 = arith.constant 0 : index
    %c0_7 = arith.constant 0 : index
    %6 = vector.load %arg3[%c0_6, %c0_7] : memref<2x32xf32, #tpu.memory_space<vmem>>, vector<2x32xf32>
    %7 = tpu.concatenate %4, %2 in 0 : vector<1x32xf32>, vector<1x32xf32> -> vector<2x32xf32>
    %cst_8 = arith.constant dense<0.000000e+00> : vector<2x2xf32>
    %8 = tpu.matmul %7, %5, %cst_8 {dimension_numbers = #tpu.dot_dimension_numbers<[1], [0], [0], [1], [0, 0, 1, 1], [], []>} : vector<2x32xf32>, vector<32x2xf32>, vector<2x2xf32> -> vector<2x2xf32>
    %cst_9 = arith.constant 0.000000e+00 : f32
    %9 = vector.broadcast %cst_9 : f32 to vector<2x2xf32>
    %10 = arith.maximumf %8, %9 : vector<2x2xf32>
    %cst_10 = arith.constant dense<0.000000e+00> : vector<2x32xf32>
    %11 = tpu.matmul %10, %6, %cst_10 {dimension_numbers = #tpu.dot_dimension_numbers<[1], [0], [0], [1], [0, 0, 1, 1], [], []>} : vector<2x2xf32>, vector<2x32xf32>, vector<2x32xf32> -> vector<2x32xf32>
    %12 = vector.extract_strided_slice %11 {offsets = [0, 0], sizes = [1, 32], strides = [1, 1]} : vector<2x32xf32> to vector<1x32xf32>
    %13 = vector.extract_strided_slice %11 {offsets = [1, 0], sizes = [1, 32], strides = [1, 1]} : vector<2x32xf32> to vector<1x32xf32>
    %14 = arith.addf %12, %13 : vector<1x32xf32>
    %15 = arith.negf %14 : vector<1x32xf32>
    %16 = math.exp %15 : vector<1x32xf32>
    %cst_11 = arith.constant 1.000000e+00 : f32
    %17 = vector.broadcast %cst_11 : f32 to vector<1x32xf32>
    %18 = arith.addf %17, %16 : vector<1x32xf32>
    %19 = arith.divf %17, %18 : vector<1x32xf32>
    %c0_12 = arith.constant 0 : index
    %c0_13 = arith.constant 0 : index
    %c0_14 = arith.constant 0 : index
    %20 = vector.load %arg4[%c0_12, %c0_13, %c0_14] : memref<1x1x32xf32, #tpu.memory_space<vmem>>, vector<1x1x32xf32>
    %21 = vector.shape_cast %20 : vector<1x1x32xf32> to vector<1x32xf32>
    %22 = vector.shape_cast %19 : vector<1x32xf32> to vector<1x1x32xf32>
    tpu.vector_store %arg4[%c0_12, %c0_13, %c0_14], %22 {strides = array<i32>} : memref<1x1x32xf32, #tpu.memory_space<vmem>>, vector<1x1x32xf32>,
    return
  }
  func.func @transform_0(%arg0: i32) -> (i32, i32, i32) {
    %c0_i32 = arith.constant 0 : i32
    %c0_i32_0 = arith.constant 0 : i32
    %c0_i32_1 = arith.constant 0 : i32
    return %arg0, %c0_i32, %c0_i32_0 : i32, i32, i32
  }
  func.func @transform_1(%arg0: i32) -> (i32, i32) {
    %c0_i32 = arith.constant 0 : i32
    %c0_i32_0 = arith.constant 0 : i32
    %c0_i32_1 = arith.constant 0 : i32
    return %c0_i32, %c0_i32_0 : i32, i32
  }
  func.func @transform_2(%arg0: i32) -> (i32, i32) {
    %c0_i32 = arith.constant 0 : i32
    %c0_i32_0 = arith.constant 0 : i32
    %c0_i32_1 = arith.constant 0 : i32
    return %c0_i32, %c0_i32_0 : i32, i32
  }
  func.func @transform_3(%arg0: i32) -> (i32, i32, i32) {
    %c0_i32 = arith.constant 0 : i32
    %c0_i32_0 = arith.constant 0 : i32
    %c0_i32_1 = arith.constant 0 : i32
    return %arg0, %c0_i32, %c0_i32_0 : i32, i32, i32
  }
}

</mosaic_0001>

<llo_original>
// kernel: tpu_custom_call.1
$region0: #{tpu_custom_call.1}
  #allocation0 [shape = 'u32[]', space=smem, size = 0x4, offset = 0x4, fixed_abs, tag = 'smem constant byte address 0x4 - core index']
  #allocation1 [shape = 'u32[144,128]{1,0:T(1,128)}', space=vmem, size = 0x12000, scoped, tag = 'internal scratch']
  %s0 = inlined_call_operand.hbm [shape: f32[2,32,256], index: 0, kind: input, shape index: {}]
  %s1 = inlined_call_operand.vmem [shape: f32[32,2], index: 1, kind: input, shape index: {}]
  %s2 = inlined_call_operand.vmem [shape: f32[2,32], index: 2, kind: input, shape index: {}]
  %s3 = inlined_call_operand.hbm [shape: f32[2,1,32], index: 3, kind: output, shape index: {}]
  %s4 = sld [smem:[#allocation0]]
  $region49: #{tpu_custom_call.1} parent=0
    _
  %s6 = ssub.s32 1, %s4
  %s7 = scalar_select 0, %s6, %s4
  $region1: #{tpu_custom_call.1} parent=0
    #allocation2 [shape = 'u8[65536]{0}', space=vmem, size = 0x10000, scoped, tag = 'input window, operand 0']
    #allocation3 [shape = 's32[2]{0}', space=sflag, size = 0x8, scoped, tag = 'scoped memory for tpu_custom_call.1']
    #allocation4 [shape = 's32[2]{0}', space=sflag, size = 0x8, scoped, tag = 'scoped memory for tpu_custom_call.1']
    #allocation5 [shape = 'u8[1024]{0}', space=vmem, size = 0x400, scoped, tag = 'output window, operand 0']
    %8 = vsyncpa [#allocation3], 0
    %s9 = scalar_lea.sflag [#allocation3], 1
    %10 = vsyncpa %s9, 0
    %11 = vsyncpa [#allocation4], 0
    %s12 = scalar_lea.sflag [#allocation4], 1
    %13 = vsyncpa %s12, 0
    loop: start=0, step=1, limit=4
    $region2: #{tpu_custom_call.1} parent=1 // loop_pre_header
      _
    $region3: #{tpu_custom_call.1} parent=1 // loop_header
      %s15 = sphi 0, %s19
      %p16 = scmp.ge.s32.totalorder %s15, 4
      %s25 = sphi 0, %s27
      %s28 = sphi 0, %s25
      %s29 = sphi 0, %s28
      %s45 = sphi 0, %s29
      %s49 = sphi 0, %s49
      %s51 = sphi 0, %s49
      %s52 = sphi 0, %s51
      %s66 = sphi 0, %s52
      %s70 = sphi 0, %s70
      %s72 = sphi 0, %s70
      %s73 = sphi 0, %s72
      %s87 = sphi 0, %s73
      %s93 = sphi 0, %s95
      %s96 = sphi 0, %s93
      %s97 = sphi 0, %s96
      %s113 = sphi 0, %s97
    $region4: #{tpu_custom_call.1} parent=1 // loop_header_branch
      %18 = sbr.rel (%p16) target = $region8
    $region5: #{tpu_custom_call.1} parent=1 // loop_body
      %s20 = ssub.s32 %s15, 1
      %s21 = ssub.s32 %s15, 2
      %s22 = sadd.s32 %s15, 1
      %s23 = ssub.s32 %s15, %s22
      %p24 = scmp.eq.s32.totalorder %s23, 0
      %s26 = sadd.s32 %s25, 1
      %s27 = scalar_select %p24, %s25, %s26
      %p30 = pneg %p24
      %p31 = scmp.eq.s32.totalorder %s15, 1
      %p32 = por %p30, %p31
      %p33 = scmp.ne.s32.totalorder %s25, %s28
      %p34 = scmp.eq.s32.totalorder %s15, 0
      %p35 = por %p33, %p34
      %p36 = scmp.ne.s32.totalorder %s25, %s28
      %p37 = scmp.eq.s32.totalorder %s20, 1
      %p38 = por %p36, %p37
      %p39 = scmp.ne.s32.totalorder %s28, %s29
      %p40 = scmp.eq.s32.totalorder %s20, 0
      %p41 = por %p39, %p40
      %p42 = scmp.ne.s32.totalorder %s28, %s29
      %p43 = scmp.eq.s32.totalorder %s21, 1
      %p44 = por %p42, %p43
      %p46 = scmp.ne.s32.totalorder %s29, %s45
      %p47 = scmp.eq.s32.totalorder %s21, 0
      %p48 = por %p46, %p47
      %s50 = sadd.s32 %s49, 1
      %p53 = scmp.eq.s32.totalorder %s15, 1
      %p54 = scmp.ne.s32.totalorder %s49, %s51
      %p55 = scmp.eq.s32.totalorder %s15, 0
      %p56 = por %p54, %p55
      %p57 = scmp.ne.s32.totalorder %s49, %s51
      %p58 = scmp.eq.s32.totalorder %s20, 1
      %p59 = por %p57, %p58
      %p60 = scmp.ne.s32.totalorder %s51, %s52
      %p61 = scmp.eq.s32.totalorder %s20, 0
      %p62 = por %p60, %p61
      %p63 = scmp.ne.s32.totalorder %s51, %s52
      %p64 = scmp.eq.s32.totalorder %s21, 1
      %p65 = por %p63, %p64
      %p67 = scmp.ne.s32.totalorder %s52, %s66
      %p68 = scmp.eq.s32.totalorder %s21, 0
      %p69 = por %p67, %p68
      %s71 = sadd.s32 %s70, 1
      %p74 = scmp.eq.s32.totalorder %s15, 1
      %p75 = scmp.ne.s32.totalorder %s70, %s72
      %p76 = scmp.eq.s32.totalorder %s15, 0
      %p77 = por %p75, %p76
      %p78 = scmp.ne.s32.totalorder %s70, %s72
      %p79 = scmp.eq.s32.totalorder %s20, 1
      %p80 = por %p78, %p79
      %p81 = scmp.ne.s32.totalorder %s72, %s73
      %p82 = scmp.eq.s32.totalorder %s20, 0
      %p83 = por %p81, %p82
      %p84 = scmp.ne.s32.totalorder %s72, %s73
      %p85 = scmp.eq.s32.totalorder %s21, 1
      %p86 = por %p84, %p85
      %p88 = scmp.ne.s32.totalorder %s73, %s87
      %p89 = scmp.eq.s32.totalorder %s21, 0
      %p90 = por %p88, %p89
      %s91 = ssub.s32 %s15, %s22
      %p92 = scmp.eq.s32.totalorder %s91, 0
      %s94 = sadd.s32 %s93, 1
      %s95 = scalar_select %p92, %s93, %s94
      %p98 = pneg %p92
      %p99 = scmp.eq.s32.totalorder %s15, 1
      %p100 = por %p98, %p99
      %p101 = scmp.ne.s32.totalorder %s93, %s96
      %p102 = scmp.eq.s32.totalorder %s15, 0
      %p103 = por %p101, %p102
      %p104 = scmp.ne.s32.totalorder %s93, %s96
      %p105 = scmp.eq.s32.totalorder %s20, 1
      %p106 = por %p104, %p105
      %p107 = scmp.ne.s32.totalorder %s96, %s97
      %p108 = scmp.eq.s32.totalorder %s20, 0
      %p109 = por %p107, %p108
      %p110 = scmp.ne.s32.totalorder %s96, %s97
      %p111 = scmp.eq.s32.totalorder %s21, 1
      %p112 = por %p110, %p111
      %p114 = scmp.ne.s32.totalorder %s97, %s113
      %p115 = scmp.eq.s32.totalorder %s21, 0
      %p116 = por %p114, %p115
      %p117 = scmp.le.s32.totalorder 1, %s15
      %p118 = scmp.lt.s32.totalorder %s15, 3
      %p119 = pnand %p117, %p118
      %p120 = pneg %p119
      // Predicated region
      $region9: #{tpu_custom_call.1} parent=5 // pred_check
        _
      $region10: #{tpu_custom_call.1} parent=5 // pred_check_branch
        %122 = sbr.rel (%p119) target = $region12
      $region11: #{tpu_custom_call.1} parent=5 // pred_region
        %s123 = ssub.s32 %s15, 1
        // Predicated region
        $region13: #{tpu_custom_call.1} parent=11 // pred_check
          %p124 = pneg %p62
        $region14: #{tpu_custom_call.1} parent=11 // pred_check_branch
          %126 = sbr.rel (%p124) target = $region16
        $region15: #{tpu_custom_call.1} parent=11 // pred_region
          _
        $region16: #{tpu_custom_call.1} parent=11 // pred_fallthru
          _
        // Predicated region
        $region17: #{tpu_custom_call.1} parent=11 // pred_check
          %p127 = pneg %p83
        $region18: #{tpu_custom_call.1} parent=11 // pred_check_branch
          %129 = sbr.rel (%p127) target = $region20
        $region19: #{tpu_custom_call.1} parent=11 // pred_region
          _
        $region20: #{tpu_custom_call.1} parent=11 // pred_fallthru
          _
      $region12: #{tpu_custom_call.1} parent=5 // pred_fallthru
        _
      %p130 = scmp.lt.s32.totalorder %s15, 2
      // Predicated region
      $region21: #{tpu_custom_call.1} parent=5 // pred_check
        %p131 = pneg %p130
      $region22: #{tpu_custom_call.1} parent=5 // pred_check_branch
        %133 = sbr.rel (%p131) target = $region24
      $region23: #{tpu_custom_call.1} parent=5 // pred_region
        // Predicated region
        $region25: #{tpu_custom_call.1} parent=23 // pred_check
          %p134 = pneg %p35
        $region26: #{tpu_custom_call.1} parent=23 // pred_check_branch
          %136 = sbr.rel (%p134) target = $region28
        $region27: #{tpu_custom_call.1} parent=23 // pred_region
          %s137 = sand.u32 %s25, 1
          %s138 = scalar_lea.sflag [#allocation3], %s137
          %s139 = sand.u32 %s25, 1
          %s140 = smul.addr %s139, 64
          %s141 = scalar_lea.vmem [#allocation2], %s140
          %s143 = ssub.s32 1024, 1024
          %144 = vsyncadd %s138, %s143
          %s145 = smul.addr %s15, 8
          %s146 = smul.addr %s145, 128
          %s147 = scalar_lea.hbm %s0, %s146
          %s148 = sshll.u32 %s141, 4
          %s149 = int_to_ptr.vmem [resolvable:$true] %s148
          %154 = dma.hbm_to_vmem [thread:$0]  %s147, 1024, %s149, %s138, 256, 256, 16
        $region28: #{tpu_custom_call.1} parent=23 // pred_fallthru
          _
      $region24: #{tpu_custom_call.1} parent=5 // pred_fallthru
        _
      %p155 = scmp.le.s32.totalorder 1, %s15
      %p156 = scmp.lt.s32.totalorder %s15, 3
      %p157 = pnand %p155, %p156
      %p158 = pneg %p157
      // Predicated region
      $region29: #{tpu_custom_call.1} parent=5 // pred_check
        _
      $region30: #{tpu_custom_call.1} parent=5 // pred_check_branch
        %160 = sbr.rel (%p157) target = $region32
      $region31: #{tpu_custom_call.1} parent=5 // pred_region
        %s161 = ssub.s32 %s15, 1
        %s162 = sand.u32 %s28, 1
        %s163 = scalar_lea.sflag [#allocation3], %s162
        %s164 = sand.u32 %s28, 1
        %s165 = smul.addr %s164, 64
        %s166 = scalar_lea.vmem [#allocation2], %s165
        // Predicated region
        $region33: #{tpu_custom_call.1} parent=31 // pred_check
          %p167 = pneg %p41
        $region34: #{tpu_custom_call.1} parent=31 // pred_check_branch
          %169 = sbr.rel (%p167) target = $region36
        $region35: #{tpu_custom_call.1} parent=31 // pred_region
          %170 = dma.done %s163, 1024
        $region36: #{tpu_custom_call.1} parent=31 // pred_fallthru
          _
        %s171 = sand.u32 %s28, 1
        %s172 = scalar_lea.sflag [#allocation3], %s171
        %s173 = sand.u32 %s28, 1
        %s174 = smul.addr %s173, 64
        %s175 = scalar_lea.vmem [#allocation2], %s174
        %p176 = pneg %p41
        %p177 = pneg %p38
        %p178 = pneg %p62
        %p179 = pneg %p59
        %p180 = pneg %p83
        %p181 = pneg %p80
        %p182 = pneg %p109
        %p183 = pneg %p106
        %s184 = sand.u32 %s96, 1
        %s185 = scalar_lea.sflag [#allocation4], %s184
        %s186 = sand.u32 %s96, 1
        %s187 = scalar_lea.vmem [#allocation5], %s186
        %v188 = vld [vmem:[%s166] sm:$0xff]
        %v189 = vld [vmem:[%s166 + $0x8] sm:$0xff]
        %v190 = vld [vmem:[%s166 + $0x10] sm:$0xff]
        %v191 = vld [vmem:[%s166 + $0x18] sm:$0xff]
        %v192 = vld [vmem:[%s166 + $0x20] sm:$0xff]
        %v193 = vld [vmem:[%s166 + $0x28] sm:$0xff]
        %v194 = vld [vmem:[%s166 + $0x30] sm:$0xff]
        %v195 = vld [vmem:[%s166 + $0x38] sm:$0xff]
        %v196 = vadd.f32 %v188, %v189
        %197 = vadd.xlane.f32.xlu0 %v196
        %v198 = vpop.xlane.xlu0 %197
        %v199 = vadd.f32 %v190, %v191
        %200 = vadd.xlane.f32.xlu0 %v199
        %v201 = vpop.xlane.xlu0 %200
        %v202 = vadd.f32 %v192, %v193
        %203 = vadd.xlane.f32.xlu0 %v202
        %v204 = vpop.xlane.xlu0 %203
        %v205 = vadd.f32 %v194, %v195
        %206 = vadd.xlane.f32.xlu0 %v205
        %v207 = vpop.xlane.xlu0 %206
        %v208 = vmax.f32 %v188, %v189
        %209 = vmax.xlane.f32.xlu0 %v208
        %v210 = vpop.xlane.xlu0 %209
        %v211 = vmax.f32 %v190, %v191
        %212 = vmax.xlane.f32.xlu0 %v211
        %v213 = vpop.xlane.xlu0 %212
        %v214 = vmax.f32 %v192, %v193
        %215 = vmax.xlane.f32.xlu0 %v214
        %v216 = vpop.xlane.xlu0 %215
        %v217 = vmax.f32 %v194, %v195
        %218 = vmax.xlane.f32.xlu0 %v217
        %v219 = vpop.xlane.xlu0 %218
        %v220 = vmul.f32 %v198, 0.00390625
        %v221 = vmul.f32 %v201, 0.00390625
        %v222 = vmul.f32 %v204, 0.00390625
        %v223 = vmul.f32 %v207, 0.00390625
        %v224 = vld [vmem:[%s1] sm:$0xff]
        %v225 = vld [vmem:[%s1 + $0x8] sm:$0xff]
        %v226 = vld [vmem:[%s1 + $0x10] sm:$0xff]
        %v227 = vld [vmem:[%s1 + $0x18] sm:$0xff]
        %v228 = vld [vmem:[%s2] sm:$0x3]
        %v233 = vlaneseq
        %v234 = vand.u32 %v233, 127
        %v235 = vlaneseq
        %v236 = vshrl.u32 %v235, 7
        %v237 = vsub.s32 %v234, %v236
        %v238 = vrot.slane %v220, %v237
        %v239 = vadd.s32 %v234, 4294967288
        %v240 = vlaneseq
        %v241 = vshrl.u32 %v240, 7
        %v242 = vsub.s32 %v239, %v241
        %v243 = vrot.slane %v221, %v242
        %vm244 = vcmask 130112
        %v245 = vsel %vm244, %v243, %v238
        %v246 = vadd.s32 %v234, 4294967280
        %v247 = vlaneseq
        %v248 = vshrl.u32 %v247, 7
        %v249 = vsub.s32 %v246, %v248
        %v250 = vrot.slane %v222, %v249
        %vm251 = vcmask 195712
        %v252 = vsel %vm251, %v250, %v245
        %v253 = vadd.s32 %v234, 4294967272
        %v254 = vlaneseq
        %v255 = vshrl.u32 %v254, 7
        %v256 = vsub.s32 %v253, %v255
        %v257 = vrot.slane %v223, %v256
        %vm258 = vcmask 261312
        %v259 = vsel %vm258, %v257, %v252
        %v265 = vlaneseq
        %v266 = vshrl.u32 %v265, 7
        %v267 = vsub.s32 %v234, %v266
        %v268 = vrot.slane %v210, %v267
        %v269 = vlaneseq
        %v270 = vshrl.u32 %v269, 7
        %v271 = vsub.s32 %v239, %v270
        %v272 = vrot.slane %v213, %v271
        %v273 = vsel %vm244, %v272, %v268
        %v274 = vlaneseq
        %v275 = vshrl.u32 %v274, 7
        %v276 = vsub.s32 %v246, %v275
        %v277 = vrot.slane %v216, %v276
        %v278 = vsel %vm251, %v277, %v273
        %v279 = vlaneseq
        %v280 = vshrl.u32 %v279, 7
        %v281 = vsub.s32 %v253, %v280
        %v282 = vrot.slane %v219, %v281
        %v283 = vsel %vm258, %v282, %v278
        %vm285 = vcmask 1040384
        %v286 = vsel %vm285, %v259, %v283
        %vm287 = vcmask 261120
        %v289 = vsel %vm287, %v286, 0
        %291 = vmatprep.subr.mxu0 0.0
        %292 = vmatpush1.msra.mxu0 0.0
        %293 = vmatprep.subr.mxu0 0.0
        %294 = vmatpush1.msra.mxu0 0.0
        %295 = vmatprep.subr.mxu0 0.0
        %296 = vmatpush1.msra.mxu0 0.0
        %297 = vmatprep.subr.mxu0 0.0
        %298 = vmatpush1.msra.mxu0 0.0
        %299 = vmatprep.subr.mxu0 0.0
        %300 = vmatpush1.msra.mxu0 0.0
        %301 = vmatprep.subr.mxu0 0.0
        %302 = vmatpush1.msra.mxu0 0.0
        %303 = vmatprep.subr.mxu0 0.0
        %304 = vmatpush1.msra.mxu0 0.0
        %305 = vmatprep.subr.mxu0 0.0
        %306 = vmatpush1.msra.mxu0 0.0
        %307 = vmatprep.subr.mxu0 0.0
        %308 = vmatpush1.msra.mxu0 0.0
        %309 = vmatprep.subr.mxu0 0.0
        %310 = vmatpush1.msra.mxu0 0.0
        %311 = vmatprep.subr.mxu0 0.0
        %312 = vmatpush1.msra.mxu0 0.0
        %313 = vmatprep.subr.mxu0 0.0
        %314 = vmatpush1.msra.mxu0 0.0
        %315 = vmatprep.subr.mxu0 0.0
        %316 = vmatpush1.msra.mxu0 %v227
        %317 = vmatprep.subr.mxu0 0.0
        %318 = vmatpush1.msra.mxu0 %v226
        %319 = vmatprep.subr.mxu0 0.0
        %320 = vmatpush1.msra.mxu0 %v225
        %321 = vmatprep.subr.mxu0 0.0
        %322 = vmatpush1.msra.mxu0 %v224
        %323 = vmatprep.subr.mxu0 0.0
        %324 = vmatpush2.msra.mxu0 0.0
        %325 = vmatprep.subr.mxu0 0.0
        %326 = vmatpush2.msra.mxu0 0.0
        %327 = vmatprep.subr.mxu0 0.0
        %328 = vmatpush2.msra.mxu0 0.0
        %329 = vmatprep.subr.mxu0 0.0
        %330 = vmatpush2.msra.mxu0 0.0
        %331 = vmatprep.subr.mxu0 0.0
        %332 = vmatpush2.msra.mxu0 0.0
        %333 = vmatprep.subr.mxu0 0.0
        %334 = vmatpush2.msra.mxu0 0.0
        %335 = vmatprep.subr.mxu0 0.0
        %336 = vmatpush2.msra.mxu0 0.0
        %337 = vmatprep.subr.mxu0 0.0
        %338 = vmatpush2.msra.mxu0 0.0
        %339 = vmatprep.subr.mxu0 0.0
        %340 = vmatpush2.msra.mxu0 0.0
        %341 = vmatprep.subr.mxu0 0.0
        %342 = vmatpush2.msra.mxu0 0.0
        %343 = vmatprep.subr.mxu0 0.0
        %344 = vmatpush2.msra.mxu0 0.0
        %345 = vmatprep.subr.mxu0 0.0
        %346 = vmatpush2.msra.mxu0 0.0
        %347 = vmatprep.subr.mxu0 0.0
        %348 = vmatpush2.msra.mxu0 0.0
        %349 = vmatprep.subr.mxu0 0.0
        %350 = vmatpush2.msra.mxu0 0.0
        %351 = vmatprep.subr.mxu0 0.0
        %352 = vmatpush2.msra.mxu0 0.0
        %353 = vmatprep.subr.mxu0 0.0
        %354 = vmatpush2.msra.mxu0 0.0
        %355 = vmatprep.mubr.f32.mxu0 0.0
        %356 = vmatmul.mubr.f32.gmra.mxu0 %v289
        %v357 = vpop.f32.mrf.mxu0
        %v358 = vadd.f32 0.0, %v357
        %v359 = vpop.f32.mrf.mxu0
        %360 = vdwg.mxu0
        %v361 = vmax.f32 %v358, 0.0
        %vm362 = vcmask 15360
        %v364 = vsel %vm362, %v361, 0
        %vm366 = vcmask 1041408
        %v368 = vsel %vm366, %v228, 0
        %370 = vmatprep.subr.mxu0 0.0
        %371 = vmatpush1.msra.mxu0 0.0
        %372 = vmatprep.subr.mxu0 0.0
        %373 = vmatpush1.msra.mxu0 0.0
        %374 = vmatprep.subr.mxu0 0.0
        %375 = vmatpush1.msra.mxu0 0.0
        %376 = vmatprep.subr.mxu0 0.0
        %377 = vmatpush1.msra.mxu0 0.0
        %378 = vmatprep.subr.mxu0 0.0
        %379 = vmatpush1.msra.mxu0 0.0
        %380 = vmatprep.subr.mxu0 0.0
        %381 = vmatpush1.msra.mxu0 0.0
        %382 = vmatprep.subr.mxu0 0.0
        %383 = vmatpush1.msra.mxu0 0.0
        %384 = vmatprep.subr.mxu0 0.0
        %385 = vmatpush1.msra.mxu0 0.0
        %386 = vmatprep.subr.mxu0 0.0
        %387 = vmatpush1.msra.mxu0 0.0
        %388 = vmatprep.subr.mxu0 0.0
        %389 = vmatpush1.msra.mxu0 0.0
        %390 = vmatprep.subr.mxu0 0.0
        %391 = vmatpush1.msra.mxu0 0.0
        %392 = vmatprep.subr.mxu0 0.0
        %393 = vmatpush1.msra.mxu0 0.0
        %394 = vmatprep.subr.mxu0 0.0
        %395 = vmatpush1.msra.mxu0 0.0
        %396 = vmatprep.subr.mxu0 0.0
        %397 = vmatpush1.msra.mxu0 0.0
        %398 = vmatprep.subr.mxu0 0.0
        %399 = vmatpush1.msra.mxu0 0.0
        %400 = vmatprep.subr.mxu0 0.0
        %401 = vmatpush1.msra.mxu0 %v368
        %402 = vmatprep.subr.mxu0 0.0
        %403 = vmatpush2.msra.mxu0 0.0
        %404 = vmatprep.subr.mxu0 0.0
        %405 = vmatpush2.msra.mxu0 0.0
        %406 = vmatprep.subr.mxu0 0.0
        %407 = vmatpush2.msra.mxu0 0.0
        %408 = vmatprep.subr.mxu0 0.0
        %409 = vmatpush2.msra.mxu0 0.0
        %410 = vmatprep.subr.mxu0 0.0
        %411 = vmatpush2.msra.mxu0 0.0
        %412 = vmatprep.subr.mxu0 0.0
        %413 = vmatpush2.msra.mxu0 0.0
        %414 = vmatprep.subr.mxu0 0.0
        %415 = vmatpush2.msra.mxu0 0.0
        %416 = vmatprep.subr.mxu0 0.0
        %417 = vmatpush2.msra.mxu0 0.0
        %418 = vmatprep.subr.mxu0 0.0
        %419 = vmatpush2.msra.mxu0 0.0
        %420 = vmatprep.subr.mxu0 0.0
        %421 = vmatpush2.msra.mxu0 0.0
        %422 = vmatprep.subr.mxu0 0.0
        %423 = vmatpush2.msra.mxu0 0.0
        %424 = vmatprep.subr.mxu0 0.0
        %425 = vmatpush2.msra.mxu0 0.0
        %426 = vmatprep.subr.mxu0 0.0
        %427 = vmatpush2.msra.mxu0 0.0
        %428 = vmatprep.subr.mxu0 0.0
        %429 = vmatpush2.msra.mxu0 0.0
        %430 = vmatprep.subr.mxu0 0.0
        %431 = vmatpush2.msra.mxu0 0.0
        %432 = vmatprep.subr.mxu0 0.0
        %433 = vmatpush2.msra.mxu0 0.0
        %434 = vmatprep.mubr.f32.mxu0 0.0
        %435 = vmatmul.mubr.f32.gmra.mxu0 %v364
        %v436 = vpop.f32.mrf.mxu0
        %v437 = vadd.f32 0.0, %v436
        %v438 = vpop.f32.mrf.mxu0
        %439 = vdwg.mxu0
        %v441 = vrot.slane %v437, 1
        %v443 = vadd.f32 %v437, %v441
        %v444 = vxor.u32 %v443, 2147483648
        %v445 = vmul.f32 %v444, 1.442695
        %v446 = vpow.pop %v445
        %v447 = vadd.f32 %v446, 1.0
        %v448 = vrcp.pop %v447
        %v449 = vmul.f32 1.0, %v448
        %vm450 = vcmask 253952
        %451 = vst.msk [vmem:[%s187] sm:$0x1] %vm450, %v449
        %s452 = sand.u32 %s96, 1
        %s453 = scalar_lea.sflag [#allocation4], %s452
        %s454 = sand.u32 %s96, 1
        %s455 = scalar_lea.vmem [#allocation5], %s454
        // Predicated region
        $region37: #{tpu_custom_call.1} parent=31 // pred_check
          %p456 = pneg %p106
        $region38: #{tpu_custom_call.1} parent=31 // pred_check_branch
          %458 = sbr.rel (%p456) target = $region40
        $region39: #{tpu_custom_call.1} parent=31 // pred_region
          %s460 = ssub.s32 16, 16
          %461 = vsyncadd %s453, %s460
          %s462 = smul.addr %s20, 16
          %s463 = scalar_lea.hbm %s3, %s462
          %s465 = sshll.u32 %s455, 4
          %s466 = int_to_ptr.vmem [resolvable:$true] %s465
          %468 = dma.vmem_to_hbm [thread:$0]  %s466, 16, %s463, %s453
        $region40: #{tpu_custom_call.1} parent=31 // pred_fallthru
          _
      $region32: #{tpu_custom_call.1} parent=5 // pred_fallthru
        _
      %p469 = scmp.le.s32.totalorder 2, %s15
      // Predicated region
      $region41: #{tpu_custom_call.1} parent=5 // pred_check
        %p470 = pneg %p469
      $region42: #{tpu_custom_call.1} parent=5 // pred_check_branch
        %472 = sbr.rel (%p470) target = $region44
      $region43: #{tpu_custom_call.1} parent=5 // pred_region
        %s473 = ssub.s32 %s15, 2
        // Predicated region
        $region45: #{tpu_custom_call.1} parent=43 // pred_check
          %p474 = pneg %p112
        $region46: #{tpu_custom_call.1} parent=43 // pred_check_branch
          %476 = sbr.rel (%p474) target = $region48
        $region47: #{tpu_custom_call.1} parent=43 // pred_region
          %s477 = sand.u32 %s97, 1
          %s478 = scalar_lea.sflag [#allocation4], %s477
          %s479 = sand.u32 %s97, 1
          %s480 = scalar_lea.vmem [#allocation5], %s479
          %481 = dma.done %s478, 16
        $region48: #{tpu_custom_call.1} parent=43 // pred_fallthru
          _
      $region44: #{tpu_custom_call.1} parent=5 // pred_fallthru
        _
    $region6: #{tpu_custom_call.1} parent=1 // loop_footer
      %s19 = sadd.s32 1, %s15
    $region7: #{tpu_custom_call.1} parent=1 // loop_footer_branch
      %14 = sbr.rel target = $region3
    $region8: #{tpu_custom_call.1} parent=1 // loop_exit
      _
    %482 = vsyncpa [#allocation3], 1
    %s483 = scalar_lea.sflag [#allocation3], 1
    %484 = vsyncpa %s483, 1
    %485 = vsyncpa [#allocation4], 1
    %s486 = scalar_lea.sflag [#allocation4], 1
    %487 = vsyncpa %s486, 1

</llo_original>
